<compile_context>
chip_gen: v5e
topology: v5e:2x2
jax: 0.10.0
libtpu: 0.0.40
codegen_flags: <defaults>
</compile_context>

<pallas_src>
import functools

import jax
import jax.numpy as jnp
from jax.experimental import pallas as pl
from jax.experimental.pallas import tpu as pltpu


def _round_up(x, m):
    return (x + m - 1) // m * m


def actor_mlp_kernel(x_ref, w1_ref, b1_ref, w2_ref, b2_ref, w3_ref, b3_ref,
                     o_ref, *, compute_dtype):
    # Layer 1: [TM, S_pad] @ [S_pad, 512] + b1, relu  (f32 accumulation)
    h1 = jnp.dot(x_ref[...].astype(compute_dtype),
                 w1_ref[...].astype(compute_dtype),
                 preferred_element_type=jnp.float32)
    h1 = jnp.maximum(h1 + b1_ref[...], 0.0)
    # Layer 2: [TM, 512] @ [512, 256] + b2, relu
    h2 = jnp.dot(h1.astype(compute_dtype),
                 w2_ref[...].astype(compute_dtype),
                 preferred_element_type=jnp.float32)
    h2 = jnp.maximum(h2 + b2_ref[...], 0.0)
    # Layer 3: [TM, 256] @ [256, A_pad] + b3 (no activation), lane-dense store
    out = jnp.dot(h2.astype(compute_dtype),
                  w3_ref[...].astype(compute_dtype),
                  preferred_element_type=jnp.float32)
    o_ref[...] = (out + b3_ref[...]).astype(o_ref.dtype)


@functools.partial(jax.jit, static_argnames=("block_m", "use_bf16"))
def counterfactual_actor_forward(state, params, *, block_m=256,
                                 use_bf16=False):
    """state: [B, state_dim] f32; params: dict of pre-transposed [in,out] weights.

    Returns [B, action_dim] f32. Batch many counterfactual evaluations into a
    single call so the effective B is large; the kernel tiles B with a
    'parallel' grid and keeps all weights resident in VMEM.
    """
    w1, b1, w2, b2, w3, b3 = (params["w1"], params["b1"], params["w2"],
                              params["b2"], params["w3"], params["b3"])
    B, S = state.shape
    H1 = w1.shape[1]            # 512
    H2 = w2.shape[1]            # 256
    A = w3.shape[1]             # action_dim

    # --- pad feature dims to multiples of 128 (lane-dense loads/stores) ---
    S_pad = _round_up(S, 128)
    A_pad = _round_up(A, 128)

    # --- batch tiling: minimal 8-aligned tile for a cdiv(B, block_m) grid ---
    block_m = max(8, _round_up(block_m, 8))
    n_blocks = -(-B // block_m)                    # cdiv
    tm = _round_up(-(-B // n_blocks), 8)           # <= block_m by construction
    B_pad = n_blocks * tm

    f32 = jnp.float32
    x_p = jnp.pad(state.astype(f32), ((0, B_pad - B), (0, S_pad - S)))
    w1_p = jnp.pad(w1.astype(f32), ((0, S_pad - S), (0, 0)))
    w3_p = jnp.pad(w3.astype(f32), ((0, 0), (0, A_pad - A)))
    b3_p = jnp.pad(b3.astype(f32), ((0, 0), (0, A_pad - A)))
    b1_p = b1.astype(f32)
    b2_p = b2.astype(f32)
    w2_p = w2.astype(f32)

    compute_dtype = jnp.bfloat16 if use_bf16 else jnp.float32
    kernel = functools.partial(actor_mlp_kernel, compute_dtype=compute_dtype)

    # Advisory cost estimate for XLA's surrounding-op scheduler.
    flops = 2 * B_pad * (S_pad * H1 + H1 * H2 + H2 * A_pad)
    bytes_accessed = 4 * (x_p.size + w1_p.size + b1_p.size + w2_p.size
                          + b2_p.size + w3_p.size + b3_p.size + B_pad * A_pad)
    cost = pl.CostEstimate(flops=flops, transcendentals=0,
                           bytes_accessed=bytes_accessed)

    resident = lambda shape: pl.BlockSpec(shape, lambda i: (0, 0))

    out_padded = pl.pallas_call(
        kernel,
        out_shape=jax.ShapeDtypeStruct((B_pad, A_pad), jnp.float32),
        grid=(n_blocks,),
        in_specs=[
            pl.BlockSpec((tm, S_pad), lambda i: (i, 0)),   # x: tiled over batch
            resident((S_pad, H1)), resident((1, H1)),      # layer 1 (resident)
            resident((H1, H2)), resident((1, H2)),         # layer 2 (resident)
            resident((H2, A_pad)), resident((1, A_pad)),   # layer 3 (resident)
        ],
        out_specs=pl.BlockSpec((tm, A_pad), lambda i: (i, 0)),
        compiler_params=pltpu.CompilerParams(
            dimension_semantics=("parallel",)),
        cost_estimate=cost,
    )(x_p, w1_p, b1_p, w2_p, b2_p, w3_p, b3_p)

    return out_padded[:B, :A]


def init_params(key, state_dim, action_dim):
    """Deterministic synthetic init (PyTorch-like uniform fan-in scaling)."""
    ks = jax.random.split(key, 6)

    def linear(kw, kb, fan_in, fan_out):
        bound = 1.0 / jnp.sqrt(fan_in)
        # stored as [in, out] (transposed vs. torch's [out, in])
        w = jax.random.uniform(kw, (fan_in, fan_out), jnp.float32,
                               -bound, bound)
        b = jax.random.uniform(kb, (1, fan_out), jnp.float32, -bound, bound)
        return w, b

    w1, b1 = linear(ks[0], ks[1], state_dim, 512)
    w2, b2 = linear(ks[2], ks[3], 512, 256)
    w3, b3 = linear(ks[4], ks[5], 256, action_dim)
    return dict(w1=w1, b1=b1, w2=w2, b2=b2, w3=w3, b3=b3)


def reference_forward(state, p):
    h1 = jnp.maximum(state @ p["w1"] + p["b1"], 0.0)
    h2 = jnp.maximum(h1 @ p["w2"] + p["b2"], 0.0)
    return h2 @ p["w3"] + p["b3"]


if __name__ == "__main__":
    key = jax.random.PRNGKey(0)
    k_param, k_state, k_big = jax.random.split(key, 3)

    batch = 8
    br_output_dim = 32   # state_dim of the Actor
    action_dim = 8

    params = init_params(k_param, br_output_dim, action_dim)
    state = jax.random.normal(k_state, (batch, br_output_dim), jnp.float32)

    # Small-batch f32 path (exact vs reference).
    out = counterfactual_actor_forward(state, params)
    out = jax.block_until_ready(out)
    ref = reference_forward(state, params)
    assert out.shape == (batch, action_dim)
    assert jnp.allclose(out, ref, atol=1e-4, rtol=1e-4), "f32 mismatch"

    # Batched path: many counterfactual evaluations in one call; exercises the
    # multi-step batch grid (non-multiple-of-tile B) + lane-dense padded output.
    big_batch = 300
    state_big = jax.random.normal(k_big, (big_batch, br_output_dim),
                                  jnp.float32)
    out_big = counterfactual_actor_forward(state_big, params, block_m=256)
    out_big = jax.block_until_ready(out_big)
    ref_big = reference_forward(state_big, params)
    assert out_big.shape == (big_batch, action_dim)
    assert jnp.allclose(out_big, ref_big, atol=1e-4, rtol=1e-4), \
        "batched f32 mismatch"

    # bf16-matmul path (f32 accumulation) for MXU-bound large-B use on
    # v6e/v7x; looser tolerance per bf16 input rounding.
    out_bf16 = counterfactual_actor_forward(state_big, params, block_m=256,
                                            use_bf16=True)
    out_bf16 = jax.block_until_ready(out_bf16)
    assert jnp.allclose(out_bf16, ref_big, atol=2e-2, rtol=2e-2), \
        "bf16 mismatch"

    print("KERNEL_OK")
</pallas_src>

<mosaic_0001>
module attributes {stable_mosaic.version = 11 : i64} {
  func.func @actor_mlp_kernel(%arg0: i32, %arg1: memref<8x128xf32, #tpu.memory_space<vmem>>, %arg2: memref<128x512xf32, #tpu.memory_space<vmem>>, %arg3: memref<1x512xf32, #tpu.memory_space<vmem>>, %arg4: memref<512x256xf32, #tpu.memory_space<vmem>>, %arg5: memref<1x256xf32, #tpu.memory_space<vmem>>, %arg6: memref<256x128xf32, #tpu.memory_space<vmem>>, %arg7: memref<1x128xf32, #tpu.memory_space<vmem>>, %arg8: memref<8x128xf32, #tpu.memory_space<vmem>>) attributes {dimension_semantics = [#tpu.dimension_semantics<parallel>], iteration_bounds = array<i64: 1>, scalar_prefetch = 0 : i64, scratch_operands = 0 : i64, tpu.core_type = #tpu.core_type<tc>, window_params = [{transform_indices = @transform_0, window_bounds = array<i64: 8, 128>}, {pipeline_mode = #tpu.pipeline_mode<synchronous>, transform_indices = @transform_1, window_bounds = array<i64: 128, 512>}, {pipeline_mode = #tpu.pipeline_mode<synchronous>, transform_indices = @transform_2, window_bounds = array<i64: 1, 512>}, {pipeline_mode = #tpu.pipeline_mode<synchronous>, transform_indices = @transform_3, window_bounds = array<i64: 512, 256>}, {pipeline_mode = #tpu.pipeline_mode<synchronous>, transform_indices = @transform_4, window_bounds = array<i64: 1, 256>}, {pipeline_mode = #tpu.pipeline_mode<synchronous>, transform_indices = @transform_5, window_bounds = array<i64: 256, 128>}, {pipeline_mode = #tpu.pipeline_mode<synchronous>, transform_indices = @transform_6, window_bounds = array<i64: 1, 128>}, {transform_indices = @transform_7, window_bounds = array<i64: 8, 128>}]} {
    %c0 = arith.constant 0 : index
    %c0_0 = arith.constant 0 : index
    %0 = vector.load %arg1[%c0, %c0_0] : memref<8x128xf32, #tpu.memory_space<vmem>>, vector<8x128xf32>
    %c0_1 = arith.constant 0 : index
    %c0_2 = arith.constant 0 : index
    %1 = vector.load %arg2[%c0_1, %c0_2] : memref<128x512xf32, #tpu.memory_space<vmem>>, vector<128x512xf32>
    %cst = arith.constant dense<0.000000e+00> : vector<8x512xf32>
    %2 = tpu.matmul %0, %1, %cst {dimension_numbers = #tpu.dot_dimension_numbers<[1], [0], [0], [1], [0, 0, 1, 1], [], []>} : vector<8x128xf32>, vector<128x512xf32>, vector<8x512xf32> -> vector<8x512xf32>
    %c0_3 = arith.constant 0 : index
    %c0_4 = arith.constant 0 : index
    %3 = vector.load %arg3[%c0_3, %c0_4] : memref<1x512xf32, #tpu.memory_space<vmem>>, vector<1x512xf32>
    %4 = vector.broadcast %3 : vector<1x512xf32> to vector<8x512xf32>
    %5 = arith.addf %2, %4 : vector<8x512xf32>
    %cst_5 = arith.constant 0.000000e+00 : f32
    %6 = vector.broadcast %cst_5 : f32 to vector<8x512xf32>
    %7 = arith.maximumf %5, %6 : vector<8x512xf32>
    %c0_6 = arith.constant 0 : index
    %c0_7 = arith.constant 0 : index
    %8 = vector.load %arg4[%c0_6, %c0_7] : memref<512x256xf32, #tpu.memory_space<vmem>>, vector<512x256xf32>
    %cst_8 = arith.constant dense<0.000000e+00> : vector<8x256xf32>
    %9 = tpu.matmul %7, %8, %cst_8 {dimension_numbers = #tpu.dot_dimension_numbers<[1], [0], [0], [1], [0, 0, 1, 1], [], []>} : vector<8x512xf32>, vector<512x256xf32>, vector<8x256xf32> -> vector<8x256xf32>
    %c0_9 = arith.constant 0 : index
    %c0_10 = arith.constant 0 : index
    %10 = vector.load %arg5[%c0_9, %c0_10] : memref<1x256xf32, #tpu.memory_space<vmem>>, vector<1x256xf32>
    %11 = vector.broadcast %10 : vector<1x256xf32> to vector<8x256xf32>
    %12 = arith.addf %9, %11 : vector<8x256xf32>
    %cst_11 = arith.constant 0.000000e+00 : f32
    %13 = vector.broadcast %cst_11 : f32 to vector<8x256xf32>
    %14 = arith.maximumf %12, %13 : vector<8x256xf32>
    %c0_12 = arith.constant 0 : index
    %c0_13 = arith.constant 0 : index
    %15 = vector.load %arg6[%c0_12, %c0_13] : memref<256x128xf32, #tpu.memory_space<vmem>>, vector<256x128xf32>
    %cst_14 = arith.constant dense<0.000000e+00> : vector<8x128xf32>
    %16 = tpu.matmul %14, %15, %cst_14 {dimension_numbers = #tpu.dot_dimension_numbers<[1], [0], [0], [1], [0, 0, 1, 1], [], []>} : vector<8x256xf32>, vector<256x128xf32>, vector<8x128xf32> -> vector<8x128xf32>
    %c0_15 = arith.constant 0 : index
    %c0_16 = arith.constant 0 : index
    %17 = vector.load %arg7[%c0_15, %c0_16] : memref<1x128xf32, #tpu.memory_space<vmem>>, vector<1x128xf32>
    %18 = vector.broadcast %17 : vector<1x128xf32> to vector<8x128xf32>
    %19 = arith.addf %16, %18 : vector<8x128xf32>
    %c0_17 = arith.constant 0 : index
    %c0_18 = arith.constant 0 : index
    %20 = vector.load %arg8[%c0_17, %c0_18] : memref<8x128xf32, #tpu.memory_space<vmem>>, vector<8x128xf32>
    tpu.vector_store %arg8[%c0_17, %c0_18], %19 {strides = array<i32>} : memref<8x128xf32, #tpu.memory_space<vmem>>, vector<8x128xf32>,
    return
  }
  func.func @transform_0(%arg0: i32) -> (i32, i32) {
    %c0_i32 = arith.constant 0 : i32
    %c0_i32_0 = arith.constant 0 : i32
    return %arg0, %c0_i32 : i32, i32
  }
  func.func @transform_1(%arg0: i32) -> (i32, i32) {
    %c0_i32 = arith.constant 0 : i32
    %c0_i32_0 = arith.constant 0 : i32
    %c0_i32_1 = arith.constant 0 : i32
    return %c0_i32, %c0_i32_0 : i32, i32
  }
  func.func @transform_2(%arg0: i32) -> (i32, i32) {
    %c0_i32 = arith.constant 0 : i32
    %c0_i32_0 = arith.constant 0 : i32
    %c0_i32_1 = arith.constant 0 : i32
    return %c0_i32, %c0_i32_0 : i32, i32
  }
  func.func @transform_3(%arg0: i32) -> (i32, i32) {
    %c0_i32 = arith.constant 0 : i32
    %c0_i32_0 = arith.constant 0 : i32
    %c0_i32_1 = arith.constant 0 : i32
    return %c0_i32, %c0_i32_0 : i32, i32
  }
  func.func @transform_4(%arg0: i32) -> (i32, i32) {
    %c0_i32 = arith.constant 0 : i32
    %c0_i32_0 = arith.constant 0 : i32
    %c0_i32_1 = arith.constant 0 : i32
    return %c0_i32, %c0_i32_0 : i32, i32
  }
  func.func @transform_5(%arg0: i32) -> (i32, i32) {
    %c0_i32 = arith.constant 0 : i32
    %c0_i32_0 = arith.constant 0 : i32
    %c0_i32_1 = arith.constant 0 : i32
    return %c0_i32, %c0_i32_0 : i32, i32
  }
  func.func @transform_6(%arg0: i32) -> (i32, i32) {
    %c0_i32 = arith.constant 0 : i32
    %c0_i32_0 = arith.constant 0 : i32
    %c0_i32_1 = arith.constant 0 : i32
    return %c0_i32, %c0_i32_0 : i32, i32
  }
  func.func @transform_7(%arg0: i32) -> (i32, i32) {
    %c0_i32 = arith.constant 0 : i32
    %c0_i32_0 = arith.constant 0 : i32
    return %arg0, %c0_i32 : i32, i32
  }
}

</mosaic_0001>

<llo_original>
// kernel: counterfactual_actor_forward.1
$region0: #{counterfactual_actor_forward.1}
  #allocation0 [shape = 'u32[]', space=smem, size = 0x4, offset = 0x4, fixed_abs, tag = 'smem constant byte address 0x4 - core index']
  #allocation1 [shape = 'u32[72,128]{1,0:T(1,128)}', space=vmem, size = 0x9000, scoped, tag = 'internal scratch']
  %s0 = inlined_call_operand.vmem [shape: f32[8,128], index: 0, kind: input, shape index: {}]
  %s1 = inlined_call_operand.vmem [shape: f32[128,512], index: 1, kind: input, shape index: {}]
  %s2 = inlined_call_operand.vmem [shape: f32[1,512], index: 2, kind: input, shape index: {}]
  %s3 = inlined_call_operand.vmem [shape: f32[512,256], index: 3, kind: input, shape index: {}]
  %s4 = inlined_call_operand.vmem [shape: f32[1,256], index: 4, kind: input, shape index: {}]
  %s5 = inlined_call_operand.vmem [shape: f32[256,128], index: 5, kind: input, shape index: {}]
  %s6 = inlined_call_operand.vmem [shape: f32[1,128], index: 6, kind: input, shape index: {}]
  %s7 = inlined_call_operand.hbm [shape: f32[8,128], index: 7, kind: output, shape index: {}]
  %s8 = sld [smem:[#allocation0]]
  $region38: #{counterfactual_actor_forward.1} parent=0
    _
  %s10 = ssub.s32 1, %s8
  %s11 = scalar_select 0, %s10, %s8
  $region1: #{counterfactual_actor_forward.1} parent=0
    #allocation2 [shape = 'u8[4096]{0}', space=vmem, size = 0x1000, scoped, tag = 'output window, operand 0, single buffered']
    #allocation3 [shape = 's32[1]{0}', space=sflag, size = 0x4, scoped, tag = 'scoped memory for counterfactual_actor_forward.1']
    %12 = vsyncpa [#allocation3], 0
    // Predicated region
    $region2: #{counterfactual_actor_forward.1} parent=1 // pred_check
      _
    $region3: #{counterfactual_actor_forward.1} parent=1 // pred_check_branch
      %14 = sbr.rel (0) target = $region5
    $region4: #{counterfactual_actor_forward.1} parent=1 // pred_region
      _
    $region5: #{counterfactual_actor_forward.1} parent=1 // pred_fallthru
      _
    // Predicated region
    $region6: #{counterfactual_actor_forward.1} parent=1 // pred_check
      _
    $region7: #{counterfactual_actor_forward.1} parent=1 // pred_check_branch
      %16 = sbr.rel (0) target = $region9
    $region8: #{counterfactual_actor_forward.1} parent=1 // pred_region
      _
    $region9: #{counterfactual_actor_forward.1} parent=1 // pred_fallthru
      _
    // Predicated region
    $region10: #{counterfactual_actor_forward.1} parent=1 // pred_check
      _
    $region11: #{counterfactual_actor_forward.1} parent=1 // pred_check_branch
      %18 = sbr.rel (0) target = $region13
    $region12: #{counterfactual_actor_forward.1} parent=1 // pred_region
      _
    $region13: #{counterfactual_actor_forward.1} parent=1 // pred_fallthru
      _
    // Predicated region
    $region14: #{counterfactual_actor_forward.1} parent=1 // pred_check
      _
    $region15: #{counterfactual_actor_forward.1} parent=1 // pred_check_branch
      %20 = sbr.rel (0) target = $region17
    $region16: #{counterfactual_actor_forward.1} parent=1 // pred_region
      _
    $region17: #{counterfactual_actor_forward.1} parent=1 // pred_fallthru
      _
    // Predicated region
    $region18: #{counterfactual_actor_forward.1} parent=1 // pred_check
      _
    $region19: #{counterfactual_actor_forward.1} parent=1 // pred_check_branch
      %22 = sbr.rel (0) target = $region21
    $region20: #{counterfactual_actor_forward.1} parent=1 // pred_region
      _
    $region21: #{counterfactual_actor_forward.1} parent=1 // pred_fallthru
      _
    // Predicated region
    $region22: #{counterfactual_actor_forward.1} parent=1 // pred_check
      _
    $region23: #{counterfactual_actor_forward.1} parent=1 // pred_check_branch
      %24 = sbr.rel (0) target = $region25
    $region24: #{counterfactual_actor_forward.1} parent=1 // pred_region
      _
    $region25: #{counterfactual_actor_forward.1} parent=1 // pred_fallthru
      _
    // Predicated region
    $region26: #{counterfactual_actor_forward.1} parent=1 // pred_check
      _
    $region27: #{counterfactual_actor_forward.1} parent=1 // pred_check_branch
      %26 = sbr.rel (0) target = $region29
    $region28: #{counterfactual_actor_forward.1} parent=1 // pred_region
      _
    $region29: #{counterfactual_actor_forward.1} parent=1 // pred_fallthru
      _
    %v27 = vld [vmem:[%s0] sm:$0xff]
    %v28 = vld [vmem:[%s1] sm:$0xff]
    %v29 = vld [vmem:[%s1 + $0x8] sm:$0xff]
    %v30 = vld [vmem:[%s1 + $0x10] sm:$0xff]
    %v31 = vld [vmem:[%s1 + $0x18] sm:$0xff]
    %v32 = vld [vmem:[%s1 + $0x20] sm:$0xff]
    %v33 = vld [vmem:[%s1 + $0x28] sm:$0xff]
    %v34 = vld [vmem:[%s1 + $0x30] sm:$0xff]
    %v35 = vld [vmem:[%s1 + $0x38] sm:$0xff]
    %v36 = vld [vmem:[%s1 + $0x40] sm:$0xff]
    %v37 = vld [vmem:[%s1 + $0x48] sm:$0xff]
    %v38 = vld [vmem:[%s1 + $0x50] sm:$0xff]
    %v39 = vld [vmem:[%s1 + $0x58] sm:$0xff]
    %v40 = vld [vmem:[%s1 + $0x60] sm:$0xff]
    %v41 = vld [vmem:[%s1 + $0x68] sm:$0xff]
    %v42 = vld [vmem:[%s1 + $0x70] sm:$0xff]
    %v43 = vld [vmem:[%s1 + $0x78] sm:$0xff]
    %v44 = vld [vmem:[%s1 + $0x80] sm:$0xff]
    %v45 = vld [vmem:[%s1 + $0x88] sm:$0xff]
    %v46 = vld [vmem:[%s1 + $0x90] sm:$0xff]
    %v47 = vld [vmem:[%s1 + $0x98] sm:$0xff]
    %v48 = vld [vmem:[%s1 + $0xa0] sm:$0xff]
    %v49 = vld [vmem:[%s1 + $0xa8] sm:$0xff]
    %v50 = vld [vmem:[%s1 + $0xb0] sm:$0xff]
    %v51 = vld [vmem:[%s1 + $0xb8] sm:$0xff]
    %v52 = vld [vmem:[%s1 + $0xc0] sm:$0xff]
    %v53 = vld [vmem:[%s1 + $0xc8] sm:$0xff]
    %v54 = vld [vmem:[%s1 + $0xd0] sm:$0xff]
    %v55 = vld [vmem:[%s1 + $0xd8] sm:$0xff]
    %v56 = vld [vmem:[%s1 + $0xe0] sm:$0xff]
    %v57 = vld [vmem:[%s1 + $0xe8] sm:$0xff]
    %v58 = vld [vmem:[%s1 + $0xf0] sm:$0xff]
    %v59 = vld [vmem:[%s1 + $0xf8] sm:$0xff]
    %v60 = vld [vmem:[%s1 + $0x100] sm:$0xff]
    %v61 = vld [vmem:[%s1 + $0x108] sm:$0xff]
    %v62 = vld [vmem:[%s1 + $0x110] sm:$0xff]
    %v63 = vld [vmem:[%s1 + $0x118] sm:$0xff]
    %v64 = vld [vmem:[%s1 + $0x120] sm:$0xff]
    %v65 = vld [vmem:[%s1 + $0x128] sm:$0xff]
    %v66 = vld [vmem:[%s1 + $0x130] sm:$0xff]
    %v67 = vld [vmem:[%s1 + $0x138] sm:$0xff]
    %v68 = vld [vmem:[%s1 + $0x140] sm:$0xff]
    %v69 = vld [vmem:[%s1 + $0x148] sm:$0xff]
    %v70 = vld [vmem:[%s1 + $0x150] sm:$0xff]
    %v71 = vld [vmem:[%s1 + $0x158] sm:$0xff]
    %v72 = vld [vmem:[%s1 + $0x160] sm:$0xff]
    %v73 = vld [vmem:[%s1 + $0x168] sm:$0xff]
    %v74 = vld [vmem:[%s1 + $0x170] sm:$0xff]
    %v75 = vld [vmem:[%s1 + $0x178] sm:$0xff]
    %v76 = vld [vmem:[%s1 + $0x180] sm:$0xff]
    %v77 = vld [vmem:[%s1 + $0x188] sm:$0xff]
    %v78 = vld [vmem:[%s1 + $0x190] sm:$0xff]
    %v79 = vld [vmem:[%s1 + $0x198] sm:$0xff]
    %v80 = vld [vmem:[%s1 + $0x1a0] sm:$0xff]
    %v81 = vld [vmem:[%s1 + $0x1a8] sm:$0xff]
    %v82 = vld [vmem:[%s1 + $0x1b0] sm:$0xff]
    %v83 = vld [vmem:[%s1 + $0x1b8] sm:$0xff]
    %v84 = vld [vmem:[%s1 + $0x1c0] sm:$0xff]
    %v85 = vld [vmem:[%s1 + $0x1c8] sm:$0xff]
    %v86 = vld [vmem:[%s1 + $0x1d0] sm:$0xff]
    %v87 = vld [vmem:[%s1 + $0x1d8] sm:$0xff]
    %v88 = vld [vmem:[%s1 + $0x1e0] sm:$0xff]
    %v89 = vld [vmem:[%s1 + $0x1e8] sm:$0xff]
    %v90 = vld [vmem:[%s1 + $0x1f0] sm:$0xff]
    %v91 = vld [vmem:[%s1 + $0x1f8] sm:$0xff]
    %v92 = vld [vmem:[%s2] sm:$0xf]
    %v94 = vperm.slane %v92, 0
    %v95 = vperm.slane %v92, 1
    %v96 = vperm.slane %v92, 2
    %v97 = vperm.slane %v92, 3
    %102 = vmatpush.msra.mxu0 %v88
    %103 = vmatpush.msra.mxu0 %v84
    %104 = vmatpush.msra.mxu0 %v80
    %105 = vmatpush.msra.mxu0 %v76
    %106 = vmatpush.msra.mxu0 %v72
    %107 = vmatpush.msra.mxu0 %v68
    %108 = vmatpush.msra.mxu0 %v64
    %109 = vmatpush.msra.mxu0 %v60
    %110 = vmatpush.msra.mxu0 %v56
    %111 = vmatpush.msra.mxu0 %v52
    %112 = vmatpush.msra.mxu0 %v48
    %113 = vmatpush.msra.mxu0 %v44
    %114 = vmatpush.msra.mxu0 %v40
    %115 = vmatpush.msra.mxu0 %v36
    %116 = vmatpush.msra.mxu0 %v32
    %117 = vmatpush.msra.mxu0 %v28
    %118 = vmatmul.f32.gmra.mxu0 %v27
    %v119 = vpop.f32.mrf.mxu0
    %v120 = vadd.f32 %v94, %v119
    %121 = vdwg.mxu0
    %122 = vmatpush.msra.mxu0 %v89
    %123 = vmatpush.msra.mxu0 %v85
    %124 = vmatpush.msra.mxu0 %v81
    %125 = vmatpush.msra.mxu0 %v77
    %126 = vmatpush.msra.mxu0 %v73
    %127 = vmatpush.msra.mxu0 %v69
    %128 = vmatpush.msra.mxu0 %v65
    %129 = vmatpush.msra.mxu0 %v61
    %130 = vmatpush.msra.mxu0 %v57
    %131 = vmatpush.msra.mxu0 %v53
    %132 = vmatpush.msra.mxu0 %v49
    %133 = vmatpush.msra.mxu0 %v45
    %134 = vmatpush.msra.mxu0 %v41
    %135 = vmatpush.msra.mxu0 %v37
    %136 = vmatpush.msra.mxu0 %v33
    %137 = vmatpush.msra.mxu0 %v29
    %138 = vmatmul.f32.gmra.mxu0 %v27
    %v139 = vpop.f32.mrf.mxu0
    %v140 = vadd.f32 %v95, %v139
    %141 = vdwg.mxu0
    %142 = vmatpush.msra.mxu0 %v90
    %143 = vmatpush.msra.mxu0 %v86
    %144 = vmatpush.msra.mxu0 %v82
    %145 = vmatpush.msra.mxu0 %v78
    %146 = vmatpush.msra.mxu0 %v74
    %147 = vmatpush.msra.mxu0 %v70
    %148 = vmatpush.msra.mxu0 %v66
    %149 = vmatpush.msra.mxu0 %v62
    %150 = vmatpush.msra.mxu0 %v58
    %151 = vmatpush.msra.mxu0 %v54
    %152 = vmatpush.msra.mxu0 %v50
    %153 = vmatpush.msra.mxu0 %v46
    %154 = vmatpush.msra.mxu0 %v42
    %155 = vmatpush.msra.mxu0 %v38
    %156 = vmatpush.msra.mxu0 %v34
    %157 = vmatpush.msra.mxu0 %v30
    %158 = vmatmul.f32.gmra.mxu0 %v27
    %v159 = vpop.f32.mrf.mxu0
    %v160 = vadd.f32 %v96, %v159
    %161 = vdwg.mxu0
    %162 = vmatpush.msra.mxu0 %v91
    %163 = vmatpush.msra.mxu0 %v87
    %164 = vmatpush.msra.mxu0 %v83
    %165 = vmatpush.msra.mxu0 %v79
    %166 = vmatpush.msra.mxu0 %v75
    %167 = vmatpush.msra.mxu0 %v71
    %168 = vmatpush.msra.mxu0 %v67
    %169 = vmatpush.msra.mxu0 %v63
    %170 = vmatpush.msra.mxu0 %v59
    %171 = vmatpush.msra.mxu0 %v55
    %172 = vmatpush.msra.mxu0 %v51
    %173 = vmatpush.msra.mxu0 %v47
    %174 = vmatpush.msra.mxu0 %v43
    %175 = vmatpush.msra.mxu0 %v39
    %176 = vmatpush.msra.mxu0 %v35
    %177 = vmatpush.msra.mxu0 %v31
    %178 = vmatmul.f32.gmra.mxu0 %v27
    %v179 = vpop.f32.mrf.mxu0
    %v180 = vadd.f32 %v97, %v179
    %181 = vdwg.mxu0
    %v182 = vmax.f32 %v120, 0.0
    %v183 = vmax.f32 %v140, 0.0
    %v184 = vmax.f32 %v160, 0.0
    %v185 = vmax.f32 %v180, 0.0
    %v186 = vld [vmem:[%s3] sm:$0xff]
    %v187 = vld [vmem:[%s3 + $0x8] sm:$0xff]
    %v188 = vld [vmem:[%s3 + $0x10] sm:$0xff]
    %v189 = vld [vmem:[%s3 + $0x18] sm:$0xff]
    %v190 = vld [vmem:[%s3 + $0x20] sm:$0xff]
    %v191 = vld [vmem:[%s3 + $0x28] sm:$0xff]
    %v192 = vld [vmem:[%s3 + $0x30] sm:$0xff]
    %v193 = vld [vmem:[%s3 + $0x38] sm:$0xff]
    %v194 = vld [vmem:[%s3 + $0x40] sm:$0xff]
    %v195 = vld [vmem:[%s3 + $0x48] sm:$0xff]
    %v196 = vld [vmem:[%s3 + $0x50] sm:$0xff]
    %v197 = vld [vmem:[%s3 + $0x58] sm:$0xff]
    %v198 = vld [vmem:[%s3 + $0x60] sm:$0xff]
    %v199 = vld [vmem:[%s3 + $0x68] sm:$0xff]
    %v200 = vld [vmem:[%s3 + $0x70] sm:$0xff]
    %v201 = vld [vmem:[%s3 + $0x78] sm:$0xff]
    %v202 = vld [vmem:[%s3 + $0x80] sm:$0xff]
    %v203 = vld [vmem:[%s3 + $0x88] sm:$0xff]
    %v204 = vld [vmem:[%s3 + $0x90] sm:$0xff]
    %v205 = vld [vmem:[%s3 + $0x98] sm:$0xff]
    %v206 = vld [vmem:[%s3 + $0xa0] sm:$0xff]
    %v207 = vld [vmem:[%s3 + $0xa8] sm:$0xff]
    %v208 = vld [vmem:[%s3 + $0xb0] sm:$0xff]
    %v209 = vld [vmem:[%s3 + $0xb8] sm:$0xff]
    %v210 = vld [vmem:[%s3 + $0xc0] sm:$0xff]
    %v211 = vld [vmem:[%s3 + $0xc8] sm:$0xff]
    %v212 = vld [vmem:[%s3 + $0xd0] sm:$0xff]
    %v213 = vld [vmem:[%s3 + $0xd8] sm:$0xff]
    %v214 = vld [vmem:[%s3 + $0xe0] sm:$0xff]
    %v215 = vld [vmem:[%s3 + $0xe8] sm:$0xff]
    %v216 = vld [vmem:[%s3 + $0xf0] sm:$0xff]
    %v217 = vld [vmem:[%s3 + $0xf8] sm:$0xff]
    %v218 = vld [vmem:[%s3 + $0x100] sm:$0xff]
    %v219 = vld [vmem:[%s3 + $0x108] sm:$0xff]
    %v220 = vld [vmem:[%s3 + $0x110] sm:$0xff]
    %v221 = vld [vmem:[%s3 + $0x118] sm:$0xff]
    %v222 = vld [vmem:[%s3 + $0x120] sm:$0xff]
    %v223 = vld [vmem:[%s3 + $0x128] sm:$0xff]
    %v224 = vld [vmem:[%s3 + $0x130] sm:$0xff]
    %v225 = vld [vmem:[%s3 + $0x138] sm:$0xff]
    %v226 = vld [vmem:[%s3 + $0x140] sm:$0xff]
    %v227 = vld [vmem:[%s3 + $0x148] sm:$0xff]
    %v228 = vld [vmem:[%s3 + $0x150] sm:$0xff]
    %v229 = vld [vmem:[%s3 + $0x158] sm:$0xff]
    %v230 = vld [vmem:[%s3 + $0x160] sm:$0xff]
    %v231 = vld [vmem:[%s3 + $0x168] sm:$0xff]
    %v232 = vld [vmem:[%s3 + $0x170] sm:$0xff]
    %v233 = vld [vmem:[%s3 + $0x178] sm:$0xff]
    %v234 = vld [vmem:[%s3 + $0x180] sm:$0xff]
    %v235 = vld [vmem:[%s3 + $0x188] sm:$0xff]
    %v236 = vld [vmem:[%s3 + $0x190] sm:$0xff]
    %v237 = vld [vmem:[%s3 + $0x198] sm:$0xff]
    %v238 = vld [vmem:[%s3 + $0x1a0] sm:$0xff]
    %v239 = vld [vmem:[%s3 + $0x1a8] sm:$0xff]
    %v240 = vld [vmem:[%s3 + $0x1b0] sm:$0xff]
    %v241 = vld [vmem:[%s3 + $0x1b8] sm:$0xff]
    %v242 = vld [vmem:[%s3 + $0x1c0] sm:$0xff]
    %v243 = vld [vmem:[%s3 + $0x1c8] sm:$0xff]
    %v244 = vld [vmem:[%s3 + $0x1d0] sm:$0xff]
    %v245 = vld [vmem:[%s3 + $0x1d8] sm:$0xff]
    %v246 = vld [vmem:[%s3 + $0x1e0] sm:$0xff]
    %v247 = vld [vmem:[%s3 + $0x1e8] sm:$0xff]
    %v248 = vld [vmem:[%s3 + $0x1f0] sm:$0xff]
    %v249 = vld [vmem:[%s3 + $0x1f8] sm:$0xff]
    %v250 = vld [vmem:[%s3 + $0x200] sm:$0xff]
    %v251 = vld [vmem:[%s3 + $0x208] sm:$0xff]
    %v252 = vld [vmem:[%s3 + $0x210] sm:$0xff]
    %v253 = vld [vmem:[%s3 + $0x218] sm:$0xff]
    %v254 = vld [vmem:[%s3 + $0x220] sm:$0xff]
    %v255 = vld [vmem:[%s3 + $0x228] sm:$0xff]
    %v256 = vld [vmem:[%s3 + $0x230] sm:$0xff]
    %v257 = vld [vmem:[%s3 + $0x238] sm:$0xff]
    %v258 = vld [vmem:[%s3 + $0x240] sm:$0xff]
    %v259 = vld [vmem:[%s3 + $0x248] sm:$0xff]
    %v260 = vld [vmem:[%s3 + $0x250] sm:$0xff]
    %v261 = vld [vmem:[%s3 + $0x258] sm:$0xff]
    %v262 = vld [vmem:[%s3 + $0x260] sm:$0xff]
    %v263 = vld [vmem:[%s3 + $0x268] sm:$0xff]
    %v264 = vld [vmem:[%s3 + $0x270] sm:$0xff]
    %v265 = vld [vmem:[%s3 + $0x278] sm:$0xff]
    %v266 = vld [vmem:[%s3 + $0x280] sm:$0xff]
    %v267 = vld [vmem:[%s3 + $0x288] sm:$0xff]
    %v268 = vld [vmem:[%s3 + $0x290] sm:$0xff]
    %v269 = vld [vmem:[%s3 + $0x298] sm:$0xff]
    %v270 = vld [vmem:[%s3 + $0x2a0] sm:$0xff]
    %v271 = vld [vmem:[%s3 + $0x2a8] sm:$0xff]
    %v272 = vld [vmem:[%s3 + $0x2b0] sm:$0xff]
    %v273 = vld [vmem:[%s3 + $0x2b8] sm:$0xff]
    %v274 = vld [vmem:[%s3 + $0x2c0] sm:$0xff]
    %v275 = vld [vmem:[%s3 + $0x2c8] sm:$0xff]
    %v276 = vld [vmem:[%s3 + $0x2d0] sm:$0xff]
    %v277 = vld [vmem:[%s3 + $0x2d8] sm:$0xff]
    %v278 = vld [vmem:[%s3 + $0x2e0] sm:$0xff]
    %v279 = vld [vmem:[%s3 + $0x2e8] sm:$0xff]
    %v280 = vld [vmem:[%s3 + $0x2f0] sm:$0xff]
    %v281 = vld [vmem:[%s3 + $0x2f8] sm:$0xff]
    %v282 = vld [vmem:[%s3 + $0x300] sm:$0xff]
    %v283 = vld [vmem:[%s3 + $0x308] sm:$0xff]
    %v284 = vld [vmem:[%s3 + $0x310] sm:$0xff]
    %v285 = vld [vmem:[%s3 + $0x318] sm:$0xff]
    %v286 = vld [vmem:[%s3 + $0x320] sm:$0xff]
    %v287 = vld [vmem:[%s3 + $0x328] sm:$0xff]
    %v288 = vld [vmem:[%s3 + $0x330] sm:$0xff]
    %v289 = vld [vmem:[%s3 + $0x338] sm:$0xff]
    %v290 = vld [vmem:[%s3 + $0x340] sm:$0xff]
    %v291 = vld [vmem:[%s3 + $0x348] sm:$0xff]
    %v292 = vld [vmem:[%s3 + $0x350] sm:$0xff]
    %v293 = vld [vmem:[%s3 + $0x358] sm:$0xff]
    %v294 = vld [vmem:[%s3 + $0x360] sm:$0xff]
    %v295 = vld [vmem:[%s3 + $0x368] sm:$0xff]
    %v296 = vld [vmem:[%s3 + $0x370] sm:$0xff]
    %v297 = vld [vmem:[%s3 + $0x378] sm:$0xff]
    %v298 = vld [vmem:[%s3 + $0x380] sm:$0xff]
    %v299 = vld [vmem:[%s3 + $0x388] sm:$0xff]
    %v300 = vld [vmem:[%s3 + $0x390] sm:$0xff]
    %v301 = vld [vmem:[%s3 + $0x398] sm:$0xff]
    %v302 = vld [vmem:[%s3 + $0x3a0] sm:$0xff]
    %v303 = vld [vmem:[%s3 + $0x3a8] sm:$0xff]
    %v304 = vld [vmem:[%s3 + $0x3b0] sm:$0xff]
    %v305 = vld [vmem:[%s3 + $0x3b8] sm:$0xff]
    %v306 = vld [vmem:[%s3 + $0x3c0] sm:$0xff]
    %v307 = vld [vmem:[%s3 + $0x3c8] sm:$0xff]
    %v308 = vld [vmem:[%s3 + $0x3d0] sm:$0xff]
    %v309 = vld [vmem:[%s3 + $0x3d8] sm:$0xff]
    %v310 = vld [vmem:[%s3 + $0x3e0] sm:$0xff]
    %v311 = vld [vmem:[%s3 + $0x3e8] sm:$0xff]
    %v312 = vld [vmem:[%s3 + $0x3f0] sm:$0xff]
    %v313 = vld [vmem:[%s3 + $0x3f8] sm:$0xff]
    %v314 = vld [vmem:[%s4] sm:$0x3]
    %v316 = vperm.slane %v314, 0
    %v317 = vperm.slane %v314, 1
    %320 = vmatpush.msra.mxu0 %v216
    %321 = vmatpush.msra.mxu0 %v214
    %322 = vmatpush.msra.mxu0 %v212
    %323 = vmatpush.msra.mxu0 %v210
    %324 = vmatpush.msra.mxu0 %v208
    %325 = vmatpush.msra.mxu0 %v206
    %326 = vmatpush.msra.mxu0 %v204
    %327 = vmatpush.msra.mxu0 %v202
    %328 = vmatpush.msra.mxu0 %v200
    %329 = vmatpush.msra.mxu0 %v198
    %330 = vmatpush.msra.mxu0 %v196
    %331 = vmatpush.msra.mxu0 %v194
    %332 = vmatpush.msra.mxu0 %v192
    %333 = vmatpush.msra.mxu0 %v190
    %334 = vmatpush.msra.mxu0 %v188
    %335 = vmatpush.msra.mxu0 %v186
    %336 = vmatmul.f32.gmra.mxu0 %v182
    %v337 = vpop.f32.mrf.mxu0
    %v338 = vadd.f32 %v316, %v337
    %339 = vdwg.mxu0
    %340 = vmatpush.msra.mxu0 %v248
    %341 = vmatpush.msra.mxu0 %v246
    %342 = vmatpush.msra.mxu0 %v244
    %343 = vmatpush.msra.mxu0 %v242
    %344 = vmatpush.msra.mxu0 %v240
    %345 = vmatpush.msra.mxu0 %v238
    %346 = vmatpush.msra.mxu0 %v236
    %347 = vmatpush.msra.mxu0 %v234
    %348 = vmatpush.msra.mxu0 %v232
    %349 = vmatpush.msra.mxu0 %v230
    %350 = vmatpush.msra.mxu0 %v228
    %351 = vmatpush.msra.mxu0 %v226
    %352 = vmatpush.msra.mxu0 %v224
    %353 = vmatpush.msra.mxu0 %v222
    %354 = vmatpush.msra.mxu0 %v220
    %355 = vmatpush.msra.mxu0 %v218
    %356 = vmatmul.f32.gmra.mxu0 %v183
    %v357 = vpop.f32.mrf.mxu0
    %v358 = vadd.f32 %v338, %v357
    %359 = vdwg.mxu0
    %360 = vmatpush.msra.mxu0 %v280
    %361 = vmatpush.msra.mxu0 %v278
    %362 = vmatpush.msra.mxu0 %v276
    %363 = vmatpush.msra.mxu0 %v274
    %364 = vmatpush.msra.mxu0 %v272
    %365 = vmatpush.msra.mxu0 %v270
    %366 = vmatpush.msra.mxu0 %v268
    %367 = vmatpush.msra.mxu0 %v266
    %368 = vmatpush.msra.mxu0 %v264
    %369 = vmatpush.msra.mxu0 %v262
    %370 = vmatpush.msra.mxu0 %v260
    %371 = vmatpush.msra.mxu0 %v258
    %372 = vmatpush.msra.mxu0 %v256
    %373 = vmatpush.msra.mxu0 %v254
    %374 = vmatpush.msra.mxu0 %v252
    %375 = vmatpush.msra.mxu0 %v250
    %376 = vmatmul.f32.gmra.mxu0 %v184
    %v377 = vpop.f32.mrf.mxu0
    %v378 = vadd.f32 %v358, %v377
    %379 = vdwg.mxu0
    %380 = vmatpush.msra.mxu0 %v312
    %381 = vmatpush.msra.mxu0 %v310
    %382 = vmatpush.msra.mxu0 %v308
    %383 = vmatpush.msra.mxu0 %v306
    %384 = vmatpush.msra.mxu0 %v304
    %385 = vmatpush.msra.mxu0 %v302
    %386 = vmatpush.msra.mxu0 %v300
    %387 = vmatpush.msra.mxu0 %v298
    %388 = vmatpush.msra.mxu0 %v296
    %389 = vmatpush.msra.mxu0 %v294
    %390 = vmatpush.msra.mxu0 %v292
    %391 = vmatpush.msra.mxu0 %v290
    %392 = vmatpush.msra.mxu0 %v288
    %393 = vmatpush.msra.mxu0 %v286
    %394 = vmatpush.msra.mxu0 %v284
    %395 = vmatpush.msra.mxu0 %v282
    %396 = vmatmul.f32.gmra.mxu0 %v185
    %v397 = vpop.f32.mrf.mxu0
    %v398 = vadd.f32 %v378, %v397
    %399 = vdwg.mxu0
    %400 = vmatpush.msra.mxu0 %v217
    %401 = vmatpush.msra.mxu0 %v215
    %402 = vmatpush.msra.mxu0 %v213
    %403 = vmatpush.msra.mxu0 %v211
    %404 = vmatpush.msra.mxu0 %v209
    %405 = vmatpush.msra.mxu0 %v207
    %406 = vmatpush.msra.mxu0 %v205
    %407 = vmatpush.msra.mxu0 %v203
    %408 = vmatpush.msra.mxu0 %v201
    %409 = vmatpush.msra.mxu0 %v199
    %410 = vmatpush.msra.mxu0 %v197
    %411 = vmatpush.msra.mxu0 %v195
    %412 = vmatpush.msra.mxu0 %v193
    %413 = vmatpush.msra.mxu0 %v191
    %414 = vmatpush.msra.mxu0 %v189
    %415 = vmatpush.msra.mxu0 %v187
    %416 = vmatmul.f32.gmra.mxu0 %v182
    %v417 = vpop.f32.mrf.mxu0
    %v418 = vadd.f32 %v317, %v417
    %419 = vdwg.mxu0
    %420 = vmatpush.msra.mxu0 %v249
    %421 = vmatpush.msra.mxu0 %v247
    %422 = vmatpush.msra.mxu0 %v245
    %423 = vmatpush.msra.mxu0 %v243
    %424 = vmatpush.msra.mxu0 %v241
    %425 = vmatpush.msra.mxu0 %v239
    %426 = vmatpush.msra.mxu0 %v237
    %427 = vmatpush.msra.mxu0 %v235
    %428 = vmatpush.msra.mxu0 %v233
    %429 = vmatpush.msra.mxu0 %v231
    %430 = vmatpush.msra.mxu0 %v229
    %431 = vmatpush.msra.mxu0 %v227
    %432 = vmatpush.msra.mxu0 %v225
    %433 = vmatpush.msra.mxu0 %v223
    %434 = vmatpush.msra.mxu0 %v221
    %435 = vmatpush.msra.mxu0 %v219
    %436 = vmatmul.f32.gmra.mxu0 %v183
    %v437 = vpop.f32.mrf.mxu0
    %v438 = vadd.f32 %v418, %v437
    %439 = vdwg.mxu0
    %440 = vmatpush.msra.mxu0 %v281
    %441 = vmatpush.msra.mxu0 %v279
    %442 = vmatpush.msra.mxu0 %v277
    %443 = vmatpush.msra.mxu0 %v275
    %444 = vmatpush.msra.mxu0 %v273
    %445 = vmatpush.msra.mxu0 %v271
    %446 = vmatpush.msra.mxu0 %v269
    %447 = vmatpush.msra.mxu0 %v267
    %448 = vmatpush.msra.mxu0 %v265
    %449 = vmatpush.msra.mxu0 %v263
    %450 = vmatpush.msra.mxu0 %v261
    %451 = vmatpush.msra.mxu0 %v259
    %452 = vmatpush.msra.mxu0 %v257
    %453 = vmatpush.msra.mxu0 %v255
    %454 = vmatpush.msra.mxu0 %v253
    %455 = vmatpush.msra.mxu0 %v251
    %456 = vmatmul.f32.gmra.mxu0 %v184
    %v457 = vpop.f32.mrf.mxu0
    %v458 = vadd.f32 %v438, %v457
    %459 = vdwg.mxu0
    %460 = vmatpush.msra.mxu0 %v313
    %461 = vmatpush.msra.mxu0 %v311
    %462 = vmatpush.msra.mxu0 %v309
    %463 = vmatpush.msra.mxu0 %v307
    %464 = vmatpush.msra.mxu0 %v305
    %465 = vmatpush.msra.mxu0 %v303
    %466 = vmatpush.msra.mxu0 %v301
    %467 = vmatpush.msra.mxu0 %v299
    %468 = vmatpush.msra.mxu0 %v297
    %469 = vmatpush.msra.mxu0 %v295
    %470 = vmatpush.msra.mxu0 %v293
    %471 = vmatpush.msra.mxu0 %v291
    %472 = vmatpush.msra.mxu0 %v289
    %473 = vmatpush.msra.mxu0 %v287
    %474 = vmatpush.msra.mxu0 %v285
    %475 = vmatpush.msra.mxu0 %v283
    %476 = vmatmul.f32.gmra.mxu0 %v185
    %v477 = vpop.f32.mrf.mxu0
    %v478 = vadd.f32 %v458, %v477
    %479 = vdwg.mxu0
    %v480 = vmax.f32 %v398, 0.0
    %v481 = vmax.f32 %v478, 0.0
    %v482 = vld [vmem:[%s5] sm:$0xff]
    %v483 = vld [vmem:[%s5 + $0x8] sm:$0xff]
    %v484 = vld [vmem:[%s5 + $0x10] sm:$0xff]
    %v485 = vld [vmem:[%s5 + $0x18] sm:$0xff]
    %v486 = vld [vmem:[%s5 + $0x20] sm:$0xff]
    %v487 = vld [vmem:[%s5 + $0x28] sm:$0xff]
    %v488 = vld [vmem:[%s5 + $0x30] sm:$0xff]
    %v489 = vld [vmem:[%s5 + $0x38] sm:$0xff]
    %v490 = vld [vmem:[%s5 + $0x40] sm:$0xff]
    %v491 = vld [vmem:[%s5 + $0x48] sm:$0xff]
    %v492 = vld [vmem:[%s5 + $0x50] sm:$0xff]
    %v493 = vld [vmem:[%s5 + $0x58] sm:$0xff]
    %v494 = vld [vmem:[%s5 + $0x60] sm:$0xff]
    %v495 = vld [vmem:[%s5 + $0x68] sm:$0xff]
    %v496 = vld [vmem:[%s5 + $0x70] sm:$0xff]
    %v497 = vld [vmem:[%s5 + $0x78] sm:$0xff]
    %v498 = vld [vmem:[%s5 + $0x80] sm:$0xff]
    %v499 = vld [vmem:[%s5 + $0x88] sm:$0xff]
    %v500 = vld [vmem:[%s5 + $0x90] sm:$0xff]
    %v501 = vld [vmem:[%s5 + $0x98] sm:$0xff]
    %v502 = vld [vmem:[%s5 + $0xa0] sm:$0xff]
    %v503 = vld [vmem:[%s5 + $0xa8] sm:$0xff]
    %v504 = vld [vmem:[%s5 + $0xb0] sm:$0xff]
    %v505 = vld [vmem:[%s5 + $0xb8] sm:$0xff]
    %v506 = vld [vmem:[%s5 + $0xc0] sm:$0xff]
    %v507 = vld [vmem:[%s5 + $0xc8] sm:$0xff]
    %v508 = vld [vmem:[%s5 + $0xd0] sm:$0xff]
    %v509 = vld [vmem:[%s5 + $0xd8] sm:$0xff]
    %v510 = vld [vmem:[%s5 + $0xe0] sm:$0xff]
    %v511 = vld [vmem:[%s5 + $0xe8] sm:$0xff]
    %v512 = vld [vmem:[%s5 + $0xf0] sm:$0xff]
    %v513 = vld [vmem:[%s5 + $0xf8] sm:$0xff]
    %v514 = vld [vmem:[%s6] sm:$0x1]
    %v516 = vperm.slane %v514, 0
    %518 = vmatpush.msra.mxu0 %v497
    %519 = vmatpush.msra.mxu0 %v496
    %520 = vmatpush.msra.mxu0 %v495
    %521 = vmatpush.msra.mxu0 %v494
    %522 = vmatpush.msra.mxu0 %v493
    %523 = vmatpush.msra.mxu0 %v492
    %524 = vmatpush.msra.mxu0 %v491
    %525 = vmatpush.msra.mxu0 %v490
    %526 = vmatpush.msra.mxu0 %v489
    %527 = vmatpush.msra.mxu0 %v488
    %528 = vmatpush.msra.mxu0 %v487
    %529 = vmatpush.msra.mxu0 %v486
    %530 = vmatpush.msra.mxu0 %v485
    %531 = vmatpush.msra.mxu0 %v484
    %532 = vmatpush.msra.mxu0 %v483
    %533 = vmatpush.msra.mxu0 %v482
    %534 = vmatmul.f32.gmra.mxu0 %v480
    %v535 = vpop.f32.mrf.mxu0
    %v536 = vadd.f32 %v516, %v535
    %537 = vdwg.mxu0
    %538 = vmatpush.msra.mxu0 %v513
    %539 = vmatpush.msra.mxu0 %v512
    %540 = vmatpush.msra.mxu0 %v511
    %541 = vmatpush.msra.mxu0 %v510
    %542 = vmatpush.msra.mxu0 %v509
    %543 = vmatpush.msra.mxu0 %v508
    %544 = vmatpush.msra.mxu0 %v507
    %545 = vmatpush.msra.mxu0 %v506
    %546 = vmatpush.msra.mxu0 %v505
    %547 = vmatpush.msra.mxu0 %v504
    %548 = vmatpush.msra.mxu0 %v503
    %549 = vmatpush.msra.mxu0 %v502
    %550 = vmatpush.msra.mxu0 %v501
    %551 = vmatpush.msra.mxu0 %v500
    %552 = vmatpush.msra.mxu0 %v499
    %553 = vmatpush.msra.mxu0 %v498
    %554 = vmatmul.f32.gmra.mxu0 %v481
    %v555 = vpop.f32.mrf.mxu0
    %v556 = vadd.f32 %v536, %v555
    %557 = vdwg.mxu0
    %558 = vst [vmem:[#allocation2] sm:$0xff] %v556
    // Predicated region
    $region30: #{counterfactual_actor_forward.1} parent=1 // pred_check
      _
    $region31: #{counterfactual_actor_forward.1} parent=1 // pred_check_branch
      %560 = sbr.rel (0) target = $region33
    $region32: #{counterfactual_actor_forward.1} parent=1 // pred_region
      %562 = vsyncadd [#allocation3], 0
      %s564 = sshll.u32 [#allocation2], 4
      %s565 = int_to_ptr.vmem [resolvable:$true] %s564
      %s566 = sshll.u32 %s7, 4
      %s567 = int_to_ptr.hbm [resolvable:$true] %s566
      %569 = dma.vmem_to_hbm [thread:$0]  %s565, 128, %s567, [#allocation3]
    $region33: #{counterfactual_actor_forward.1} parent=1 // pred_fallthru
      _
    // Predicated region
    $region34: #{counterfactual_actor_forward.1} parent=1 // pred_check
      _
    $region35: #{counterfactual_actor_forward.1} parent=1 // pred_check_branch
      %571 = sbr.rel (0) target = $region37
    $region36: #{counterfactual_actor_forward.1} parent=1 // pred_region
      %573 = dma.done [#allocation3], 128
    $region37: #{counterfactual_actor_forward.1} parent=1 // pred_fallthru
      _
    %574 = vsyncpa [#allocation3], 1

</llo_original>
